<compile_context>
chip_gen: v5e
topology: v5e:2x2
jax: 0.10.0
libtpu: 0.0.40
codegen_flags: <defaults>
</compile_context>

<pallas_src>
import functools

import jax
import jax.numpy as jnp
from jax import lax
from jax.experimental import pallas as pl
from jax.experimental.pallas import tpu as pltpu


def _round_up(a, m):
    return (a + m - 1) // m * m


def _cdiv(a, b):
    return -(-a // b)


# --------------------------------------------------------------------------
# sum / mean readout: (B_pad, TN) one-hot @ (TN, F) x on the MXU.
# Partial sums / counts accumulate into the resident f32 output blocks.
# --------------------------------------------------------------------------
def _segment_sum_kernel(batch_ref, x_ref, sum_ref, cnt_ref, *,
                        tiles_per_slab, tile_nodes, n_nodes):
    s = pl.program_id(0)
    i = pl.program_id(1)
    bid = s * tiles_per_slab + i          # logical node-tile id (may be a dead tile)

    @pl.when(i == 0)
    def _():
        sum_ref[...] = jnp.zeros(sum_ref.shape, sum_ref.dtype)
        cnt_ref[...] = jnp.zeros(cnt_ref.shape, cnt_ref.dtype)

    b_row = batch_ref[...]                               # (1, TN) int32, lane-dense
    tn = b_row.shape[1]
    b_pad = sum_ref.shape[0]

    # (B_pad, TN) one-hot: graphs on sublanes, nodes on lanes.  Padded and
    # dead-tile entries carry batch id == b_pad, so they never match.
    g_iota = lax.broadcasted_iota(jnp.int32, (b_pad, tn), 0)
    matches = g_iota == b_row
    one_hot = matches.astype(x_ref.dtype)

    # Zero node rows past the true node count: the x tile for the ragged tail
    # (and for clamped / replicated dead tiles) may contain garbage or NaNs,
    # and 0 * NaN = NaN would poison the matmul.
    start = bid * tile_nodes
    row_id = lax.broadcasted_iota(jnp.int32, (tn, 1), 0) + start
    x = jnp.where(row_id < n_nodes, x_ref[...], jnp.zeros((), x_ref.dtype))

    # Natural (B_pad, TN) x (TN, F) contraction; f32 accumulation on the MXU.
    sum_ref[...] += jnp.dot(one_hot, x, preferred_element_type=jnp.float32)
    # Per-graph node counts: lane-axis reduce (XLU), no extra matmul.
    cnt_ref[...] += jnp.sum(matches.astype(jnp.float32), axis=1, keepdims=True)


# --------------------------------------------------------------------------
# max readout: per-tile loop over only the graphs present in the tile
# (scalar-prefetched [g_lo, g_hi] per tile), resident f32 max accumulator.
# --------------------------------------------------------------------------
def _segment_max_kernel(g_lo_ref, g_hi_ref, batch_ref, x_ref, out_ref, *,
                        tiles_per_slab, neg_fill):
    s = pl.program_id(0)
    i = pl.program_id(1)
    bid = s * tiles_per_slab + i

    @pl.when(i == 0)
    def _():
        out_ref[...] = jnp.full(out_ref.shape, neg_fill, out_ref.dtype)

    b_col = batch_ref[...]                       # (TN, 1) int32, node-on-sublane
    x = x_ref[...]                               # (TN, F) input dtype
    fill = jnp.asarray(neg_fill, x.dtype)
    b_pad = out_ref.shape[0]
    row_iota = lax.broadcasted_iota(jnp.int32, (b_pad, 1), 0)   # hoisted

    g_lo = g_lo_ref[bid]                         # first graph present in this tile
    g_hi = g_hi_ref[bid]                         # last graph present (-1 if none)

    def body(g, carry):
        masked = jnp.where(b_col == g, x, fill)                    # (TN, F)
        row_max = jnp.max(masked, axis=0, keepdims=True)           # (1, F)
        row_max = row_max.astype(jnp.float32)
        cur = out_ref[...]
        out_ref[...] = jnp.where(row_iota == g,
                                 jnp.maximum(cur, row_max), cur)
        return carry

    lax.fori_loop(g_lo, g_hi + 1, body, 0)       # empty when g_lo > g_hi


# --------------------------------------------------------------------------
# Wrapper
# --------------------------------------------------------------------------
def gnn_pool(x, batch, num_graphs, readout="mean", tile_nodes=2048):
    """Pallas implementation of GNNPool.forward(x, batch)."""
    readout = readout.lower()
    if readout == "identity":
        return x  # no compute; passthrough
    if readout not in ("sum", "mean", "max"):
        raise ValueError(f"unknown readout: {readout}")

    n, f = x.shape
    num_graphs = int(num_graphs)
    b_pad = _round_up(max(num_graphs, 1), 8)     # sublane-aligned accumulator rows
    itemsize = jnp.dtype(x.dtype).itemsize
    f_lanes = _round_up(f, 128)                  # lane-padded width inside VMEM only

    # ---- per-chip VMEM budget ---------------------------------------------
    try:
        vmem_cap = int(pltpu.get_tpu_info().vmem_capacity_bytes)
    except Exception:                            # pragma: no cover - fallback
        vmem_cap = 64 * 1024 * 1024
    budget = (vmem_cap * 5) // 8                 # ~80 MiB on v5e/v6e, ~40 MiB on v7x

    # Per-node-row VMEM cost: double-buffered x tile + double-buffered batch
    # tile (+ one-hot temporaries for sum/mean).
    if readout == "max":
        batch_row_bytes = 128 * 4                # (TN,1) int32 lane-pads to (TN,128)
    else:
        batch_row_bytes = 8 * 4                  # (1,TN) int32 sublane-pads to (8,TN)
    per_node = 2 * f_lanes * itemsize + 2 * batch_row_bytes
    if readout != "max":
        per_node += 2 * b_pad * 4                # (B_pad, TN) one-hot / matches temps
    fixed = 4 * b_pad * f_lanes * 4 + 4 * b_pad * 128 * 4 + (2 << 20)

    cap_nodes = max(128, ((budget - fixed) // per_node) // 128 * 128)
    tn = max(128, (int(tile_nodes) // 128) * 128)
    tn = min(tn, cap_nodes)

    # ---- node tiling / slab split -------------------------------------------
    if n <= tn:
        tn = n                                   # single full tile (block == array)
        n_blocks = 1
    else:
        n_blocks = _cdiv(n, tn)
    # Split the node range across 2 slabs (the two TensorCores on v7x) when
    # there is enough work; on 1-TC chips the leading axis is just a loop.
    num_slabs = 2 if n_blocks >= 4 else 1
    tiles_per_slab = _cdiv(n_blocks, num_slabs)
    total_blocks = num_slabs * tiles_per_slab
    n_total = total_blocks * tn

    # Only `batch` is padded (cheap: int32 per node).  Pad value == b_pad never
    # matches any accumulator row, so padded / dead tiles contribute nothing.
    batch_i32 = batch.astype(jnp.int32)
    batch_p = jnp.pad(batch_i32, (0, n_total - n), constant_values=b_pad)

    vmem_limit = int(max(16 << 20,
                         min(vmem_cap - (4 << 20),
                             fixed + per_node * tn + (16 << 20))))
    cparams = pltpu.CompilerParams(
        dimension_semantics=("parallel", "arbitrary"),
        vmem_limit_bytes=vmem_limit)

    # x block index is clamped so the DMA never runs past the array; dead
    # (clamped) tiles are neutralised in-kernel via the row / batch-id masks.
    def x_index(s, i, *_):
        return (jnp.minimum(s * tiles_per_slab + i, n_blocks - 1), 0)

    x_spec = pl.BlockSpec((tn, f), x_index)
    grid = (num_slabs, tiles_per_slab)

    if readout in ("sum", "mean"):
        kernel = functools.partial(_segment_sum_kernel,
                                   tiles_per_slab=tiles_per_slab,
                                   tile_nodes=tn, n_nodes=n)
        batch_arr = batch_p.reshape(1, n_total)              # lane-dense row
        batch_spec = pl.BlockSpec((1, tn),
                                  lambda s, i: (0, s * tiles_per_slab + i))
        out_shape = (jax.ShapeDtypeStruct((num_slabs, b_pad, f), jnp.float32),
                     jax.ShapeDtypeStruct((num_slabs, b_pad, 1), jnp.float32))
        out_specs = (pl.BlockSpec((None, b_pad, f), lambda s, i: (s, 0, 0)),
                     pl.BlockSpec((None, b_pad, 1), lambda s, i: (s, 0, 0)))
        sums, cnts = pl.pallas_call(
            kernel,
            out_shape=out_shape,
            grid_spec=pltpu.PrefetchScalarGridSpec(
                num_scalar_prefetch=0,
                grid=grid,
                in_specs=[batch_spec, x_spec],
                out_specs=out_specs),
            compiler_params=cparams,
        )(batch_arr, x)
        total = jnp.sum(sums, axis=0)                         # (B_pad, F) f32, tiny
        if readout == "mean":
            cnt = jnp.maximum(jnp.sum(cnts, axis=0), 1.0)     # (B_pad, 1)
            total = total / cnt
        return total[:num_graphs].astype(x.dtype)

    # ---- max ----------------------------------------------------------------
    if jnp.issubdtype(x.dtype, jnp.floating):
        neg_fill = float("-inf")
    else:
        neg_fill = int(jnp.iinfo(x.dtype).min)

    # Per-tile graph range (exploits PyG's sorted batch vectors; still correct
    # for unsorted input, just looser).  Reads only the int32 batch ids.
    bt = batch_p.reshape(total_blocks, tn)
    in_range = bt < num_graphs
    g_lo = jnp.min(jnp.where(in_range, bt, num_graphs), axis=1).astype(jnp.int32)
    g_hi = jnp.max(jnp.where(in_range, bt, -1), axis=1).astype(jnp.int32)

    kernel = functools.partial(_segment_max_kernel,
                               tiles_per_slab=tiles_per_slab,
                               neg_fill=neg_fill)
    batch_arr = batch_p.reshape(n_total, 1)                   # node-on-sublane col
    batch_spec = pl.BlockSpec(
        (tn, 1), lambda s, i, lo, hi: (s * tiles_per_slab + i, 0))
    out_shape = jax.ShapeDtypeStruct((num_slabs, b_pad, f), jnp.float32)
    out_spec = pl.BlockSpec((None, b_pad, f), lambda s, i, lo, hi: (s, 0, 0))
    parts = pl.pallas_call(
        kernel,
        out_shape=out_shape,
        grid_spec=pltpu.PrefetchScalarGridSpec(
            num_scalar_prefetch=2,
            grid=grid,
            in_specs=[batch_spec, x_spec],
            out_specs=out_spec),
        compiler_params=cparams,
    )(g_lo, g_hi, batch_arr, x)
    out = jnp.max(parts, axis=0)[:num_graphs]                 # combine slabs (tiny)
    return out.astype(x.dtype)


# --------------------------------------------------------------------------
# Pure-JAX reference
# --------------------------------------------------------------------------
def _ref_pool(x, batch, num_graphs, readout):
    readout = readout.lower()
    if readout == "identity":
        return x
    if readout == "sum":
        return jax.ops.segment_sum(x, batch, num_segments=num_graphs)
    if readout == "mean":
        s = jax.ops.segment_sum(x, batch, num_segments=num_graphs)
        c = jax.ops.segment_sum(jnp.ones((x.shape[0], 1), x.dtype), batch,
                                num_segments=num_graphs)
        return s / jnp.maximum(c, 1.0)
    if readout == "max":
        return jax.ops.segment_max(x, batch, num_segments=num_graphs)
    raise ValueError(readout)


if __name__ == "__main__":
    key = jax.random.PRNGKey(0)

    # --- case 1: small, single tile (block == full array, no padding) -------
    n1, f1, g1 = 16, 32, 3
    x1 = jax.random.normal(key, (n1, f1), dtype=jnp.float32)
    batch1 = jnp.array([0] * 5 + [1] * 4 + [2] * 7, dtype=jnp.int32)

    # --- case 2: multi-tile + 2-slab split + ragged tail (sorted batch) -----
    n2, f2, g2 = 600, 40, 5
    sizes = [100, 150, 80, 170, 100]
    x2 = jax.random.normal(jax.random.fold_in(key, 1), (n2, f2),
                           dtype=jnp.float32)
    batch2 = jnp.concatenate(
        [jnp.full((sz,), g, jnp.int32) for g, sz in enumerate(sizes)])

    # --- case 3: same data, unsorted batch (stresses per-tile graph ranges) -
    perm = jax.random.permutation(jax.random.fold_in(key, 2), n2)
    x3, batch3 = x2[perm], batch2[perm]

    cases = [
        (x1, batch1, g1, {}),
        (x2, batch2, g2, dict(tile_nodes=128)),
        (x3, batch3, g2, dict(tile_nodes=128)),
    ]
    for ci, (xx, bb, ng, kw) in enumerate(cases):
        for readout in ("mean", "sum", "max", "identity"):
            out = jax.block_until_ready(
                gnn_pool(xx, bb, ng, readout=readout, **kw))
            ref = _ref_pool(xx, bb, ng, readout)
            assert out.shape == ref.shape and out.dtype == ref.dtype, (ci, readout)
            assert jnp.allclose(out, ref, atol=2e-4, rtol=2e-4), (ci, readout)

    print("KERNEL_OK")
</pallas_src>

<mosaic_0001>
module attributes {stable_mosaic.version = 11 : i64} {
  func.func @_segment_sum_kernel(%arg0: i32, %arg1: i32, %arg2: memref<1x16xi32, #tpu.memory_space<vmem>>, %arg3: memref<16x32xf32, #tpu.memory_space<vmem>>, %arg4: memref<1x8x32xf32, #tpu.memory_space<vmem>>, %arg5: memref<1x8x1xf32, #tpu.memory_space<vmem>>) attributes {dimension_semantics = [#tpu.dimension_semantics<parallel>, #tpu.dimension_semantics<arbitrary>], iteration_bounds = array<i64: 1, 1>, scalar_prefetch = 0 : i64, scratch_operands = 0 : i64, tpu.core_type = #tpu.core_type<tc>, window_params = [{transform_indices = @transform_0, window_bounds = array<i64: 1, 16>}, {transform_indices = @transform_1, window_bounds = array<i64: 16, 32>}, {transform_indices = @transform_2, window_bounds = array<i64: 1, 8, 32>}, {transform_indices = @transform_3, window_bounds = array<i64: 1, 8, 1>}]} {
    %c1_i32 = arith.constant 1 : i32
    %0 = arith.muli %arg0, %c1_i32 : i32
    %1 = arith.addi %0, %arg1 : i32
    %c0_i32 = arith.constant 0 : i32
    %2 = arith.cmpi eq, %arg1, %c0_i32 : i32
    %3 = arith.extui %2 : i1 to i32
    %c0_i32_0 = arith.constant 0 : i32
    %4 = arith.cmpi ne, %3, %c0_i32_0 : i32
    scf.if %4 {
      %cst_19 = arith.constant 0.000000e+00 : f32
      %39 = vector.broadcast %cst_19 : f32 to vector<8x32xf32>
      %c0_20 = arith.constant 0 : index
      %c0_21 = arith.constant 0 : index
      %c0_22 = arith.constant 0 : index
      %40 = vector.load %arg4[%c0_20, %c0_21, %c0_22] : memref<1x8x32xf32, #tpu.memory_space<vmem>>, vector<1x8x32xf32>
      %41 = vector.shape_cast %40 : vector<1x8x32xf32> to vector<8x32xf32>
      %42 = vector.shape_cast %39 : vector<8x32xf32> to vector<1x8x32xf32>
      tpu.vector_store %arg4[%c0_20, %c0_21, %c0_22], %42 {strides = array<i32>} : memref<1x8x32xf32, #tpu.memory_space<vmem>>, vector<1x8x32xf32>,
      %cst_23 = arith.constant 0.000000e+00 : f32
      %43 = vector.broadcast %cst_23 : f32 to vector<8x1xf32>
      %c0_24 = arith.constant 0 : index
      %c0_25 = arith.constant 0 : index
      %c0_26 = arith.constant 0 : index
      %44 = vector.load %arg5[%c0_24, %c0_25, %c0_26] : memref<1x8x1xf32, #tpu.memory_space<vmem>>, vector<1x8x1xf32>
      %45 = vector.shape_cast %44 : vector<1x8x1xf32> to vector<8x1xf32>
      %46 = vector.shape_cast %43 : vector<8x1xf32> to vector<1x8x1xf32>
      tpu.vector_store %arg5[%c0_24, %c0_25, %c0_26], %46 {strides = array<i32>} : memref<1x8x1xf32, #tpu.memory_space<vmem>>, vector<1x8x1xf32>,
    } else {
    }
    %c0 = arith.constant 0 : index
    %c0_1 = arith.constant 0 : index
    %5 = vector.load %arg2[%c0, %c0_1] : memref<1x16xi32, #tpu.memory_space<vmem>>, vector<1x16xi32>
    %6 = tpu.iota {dimensions = array<i32: 0>} : vector<8x16xi32>
    %7 = vector.broadcast %5 : vector<1x16xi32> to vector<8x16xi32>
    %8 = arith.cmpi eq, %6, %7 : vector<8x16xi32>
    %9 = arith.extui %8 : vector<8x16xi1> to vector<8x16xi32>
    %10 = arith.sitofp %9 : vector<8x16xi32> to vector<8x16xf32>
    %c16_i32 = arith.constant 16 : i32
    %11 = arith.muli %1, %c16_i32 : i32
    %12 = tpu.iota {dimensions = array<i32: 0>} : vector<16x1xi32>
    %13 = vector.broadcast %11 : i32 to vector<16x1xi32>
    %14 = arith.addi %12, %13 : vector<16x1xi32>
    %c16_i32_2 = arith.constant 16 : i32
    %15 = vector.broadcast %c16_i32_2 : i32 to vector<16x1xi32>
    %16 = arith.cmpi slt, %14, %15 : vector<16x1xi32>
    %c0_3 = arith.constant 0 : index
    %c0_4 = arith.constant 0 : index
    %17 = vector.load %arg3[%c0_3, %c0_4] : memref<16x32xf32, #tpu.memory_space<vmem>>, vector<16x32xf32>
    %cst = arith.constant 0.000000e+00 : f32
    %18 = vector.shape_cast %16 : vector<16x1xi1> to vector<16x1xi1>
    %19 = vector.broadcast %18 : vector<16x1xi1> to vector<16x32xi1>
    %20 = vector.broadcast %cst : f32 to vector<16x32xf32>
    %21 = arith.select %19, %17, %20 : vector<16x32xi1>, vector<16x32xf32>
    %c0_5 = arith.constant 0 : index
    %c0_6 = arith.constant 0 : index
    %c0_7 = arith.constant 0 : index
    %22 = vector.load %arg4[%c0_5, %c0_6, %c0_7] : memref<1x8x32xf32, #tpu.memory_space<vmem>>, vector<1x8x32xf32>
    %23 = vector.shape_cast %22 : vector<1x8x32xf32> to vector<8x32xf32>
    %cst_8 = arith.constant dense<0.000000e+00> : vector<8x32xf32>
    %24 = tpu.matmul %10, %21, %cst_8 {dimension_numbers = #tpu.dot_dimension_numbers<[1], [0], [0], [1], [0, 0, 1, 1], [], []>} : vector<8x16xf32>, vector<16x32xf32>, vector<8x32xf32> -> vector<8x32xf32>
    %25 = arith.addf %23, %24 : vector<8x32xf32>
    %c0_9 = arith.constant 0 : index
    %c0_10 = arith.constant 0 : index
    %c0_11 = arith.constant 0 : index
    %26 = vector.load %arg4[%c0_9, %c0_10, %c0_11] : memref<1x8x32xf32, #tpu.memory_space<vmem>>, vector<1x8x32xf32>
    %27 = vector.shape_cast %26 : vector<1x8x32xf32> to vector<8x32xf32>
    %28 = vector.shape_cast %25 : vector<8x32xf32> to vector<1x8x32xf32>
    tpu.vector_store %arg4[%c0_9, %c0_10, %c0_11], %28 {strides = array<i32>} : memref<1x8x32xf32, #tpu.memory_space<vmem>>, vector<1x8x32xf32>,
    %c0_12 = arith.constant 0 : index
    %c0_13 = arith.constant 0 : index
    %c0_14 = arith.constant 0 : index
    %29 = vector.load %arg5[%c0_12, %c0_13, %c0_14] : memref<1x8x1xf32, #tpu.memory_space<vmem>>, vector<1x8x1xf32>
    %30 = vector.shape_cast %29 : vector<1x8x1xf32> to vector<8x1xf32>
    %31 = arith.extui %8 : vector<8x16xi1> to vector<8x16xi32>
    %32 = arith.sitofp %31 : vector<8x16xi32> to vector<8x16xf32>
    %cst_15 = arith.constant dense<0.000000e+00> : vector<8xf32>
    %33 = vector.multi_reduction <add>, %32, %cst_15 [1] : vector<8x16xf32> to vector<8xf32>
    %34 = vector.shape_cast %33 : vector<8xf32> to vector<8x1xf32>
    %35 = arith.addf %30, %34 : vector<8x1xf32>
    %c0_16 = arith.constant 0 : index
    %c0_17 = arith.constant 0 : index
    %c0_18 = arith.constant 0 : index
    %36 = vector.load %arg5[%c0_16, %c0_17, %c0_18] : memref<1x8x1xf32, #tpu.memory_space<vmem>>, vector<1x8x1xf32>
    %37 = vector.shape_cast %36 : vector<1x8x1xf32> to vector<8x1xf32>
    %38 = vector.shape_cast %35 : vector<8x1xf32> to vector<1x8x1xf32>
    tpu.vector_store %arg5[%c0_16, %c0_17, %c0_18], %38 {strides = array<i32>} : memref<1x8x1xf32, #tpu.memory_space<vmem>>, vector<1x8x1xf32>,
    return
  }
  func.func @transform_0(%arg0: i32, %arg1: i32) -> (i32, i32) {
    %c1_i32 = arith.constant 1 : i32
    %0 = arith.muli %arg0, %c1_i32 : i32
    %1 = arith.addi %0, %arg1 : i32
    %c0_i32 = arith.constant 0 : i32
    %c0_i32_0 = arith.constant 0 : i32
    return %c0_i32, %1 : i32, i32
  }
  func.func @transform_1(%arg0: i32, %arg1: i32) -> (i32, i32) {
    %c1_i32 = arith.constant 1 : i32
    %0 = arith.muli %arg0, %c1_i32 : i32
    %1 = arith.addi %0, %arg1 : i32
    %c0_i32 = arith.constant 0 : i32
    %2 = arith.minsi %1, %c0_i32 : i32
    %c0_i32_0 = arith.constant 0 : i32
    %c0_i32_1 = arith.constant 0 : i32
    return %2, %c0_i32_0 : i32, i32
  }
  func.func @transform_2(%arg0: i32, %arg1: i32) -> (i32, i32, i32) {
    %c0_i32 = arith.constant 0 : i32
    %c0_i32_0 = arith.constant 0 : i32
    %c0_i32_1 = arith.constant 0 : i32
    return %arg0, %c0_i32, %c0_i32_0 : i32, i32, i32
  }
  func.func @transform_3(%arg0: i32, %arg1: i32) -> (i32, i32, i32) {
    %c0_i32 = arith.constant 0 : i32
    %c0_i32_0 = arith.constant 0 : i32
    %c0_i32_1 = arith.constant 0 : i32
    return %arg0, %c0_i32, %c0_i32_0 : i32, i32, i32
  }
}

</mosaic_0001>

<llo_original>
// kernel: tpu_custom_call.1
$region0: #{tpu_custom_call.1}
  #allocation0 [shape = 'u32[]', space=smem, size = 0x4, offset = 0x4, fixed_abs, tag = 'smem constant byte address 0x4 - core index']
  #allocation1 [shape = 'u32[72,128]{1,0:T(1,128)}', space=vmem, size = 0x9000, scoped, tag = 'internal scratch']
  %s0 = inlined_call_operand.hbm [shape: s32[1,16], index: 0, kind: input, shape index: {}]
  %s1 = inlined_call_operand.hbm [shape: f32[16,32], index: 1, kind: input, shape index: {}]
  %s2 = inlined_call_operand.hbm [shape: f32[1,8,32], index: 2, kind: output, shape index: {0}]
  %s3 = inlined_call_operand.vmem [shape: f32[1,8,1], index: 3, kind: output, shape index: {1}]
  %4 = xla_tuple %s2, %s3
  %s5 = sld [smem:[#allocation0]]
  $region38: #{tpu_custom_call.1} parent=0
    _
  %s7 = ssub.s32 1, %s5
  %s8 = scalar_select 0, %s7, %s5
  $region1: #{tpu_custom_call.1} parent=0
    #allocation2 [shape = 'u8[512]{0}', space=vmem, size = 0x400, scoped, tag = 'input window, operand 0, single buffered']
    #allocation3 [shape = 's32[1]{0}', space=sflag, size = 0x4, scoped, tag = 'scoped memory for tpu_custom_call.1']
    #allocation4 [shape = 's32[1]{0}', space=sflag, size = 0x4, scoped, tag = 'scoped memory for tpu_custom_call.1']
    #allocation5 [shape = 'u8[8192]{0}', space=vmem, size = 0x2000, scoped, tag = 'input window, operand 1, single buffered']
    #allocation6 [shape = 's32[1]{0}', space=sflag, size = 0x4, scoped, tag = 'scoped memory for tpu_custom_call.1']
    #allocation7 [shape = 'u8[4096]{0}', space=vmem, size = 0x1000, scoped, tag = 'output window, operand 0, single buffered']
    %9 = vsyncpa [#allocation3], 0
    %10 = vsyncpa [#allocation6], 0
    %11 = vsyncpa [#allocation4], 0
    // Predicated region
    $region2: #{tpu_custom_call.1} parent=1 // pred_check
      _
    $region3: #{tpu_custom_call.1} parent=1 // pred_check_branch
      %13 = sbr.rel (0) target = $region5
    $region4: #{tpu_custom_call.1} parent=1 // pred_region
      %s14 = sadd.s32 0, 0
      %16 = vsyncadd [#allocation3], 0
      %s17 = scalar_lea.hbm %s0, %s14
      %s19 = sshll.u32 %s17, 4
      %s20 = int_to_ptr.hbm [resolvable:$true] %s19
      %s21 = sshll.u32 [#allocation2], 4
      %s22 = int_to_ptr.vmem [resolvable:$true] %s21
      %24 = dma.hbm_to_vmem [thread:$0]  %s20, 16, %s22, [#allocation3]
    $region5: #{tpu_custom_call.1} parent=1 // pred_fallthru
      _
    // Predicated region
    $region6: #{tpu_custom_call.1} parent=1 // pred_check
      _
    $region7: #{tpu_custom_call.1} parent=1 // pred_check_branch
      %26 = sbr.rel (0) target = $region9
    $region8: #{tpu_custom_call.1} parent=1 // pred_region
      %s27 = sadd.s32 0, 0
      %p28 = scmp.lt.s32.totalorder %s27, 0
      %s29 = scalar_select %p28, %s27, 0
      %s30 = smul.u32 2, %s29
      %32 = vsyncadd [#allocation6], 0
      %s33 = smul.addr %s30, 8
      %s34 = scalar_lea.hbm %s1, %s33
      %s35 = sshll.u32 %s34, 4
      %s36 = int_to_ptr.hbm [resolvable:$true] %s35
      %s37 = sshll.u32 [#allocation5], 4
      %s38 = int_to_ptr.vmem [resolvable:$true] %s37
      %43 = dma.hbm_to_vmem [thread:$0]  %s36, 256, %s38, [#allocation6], 128, 128, 8
    $region9: #{tpu_custom_call.1} parent=1 // pred_fallthru
      _
    // Predicated region
    $region10: #{tpu_custom_call.1} parent=1 // pred_check
      _
    $region11: #{tpu_custom_call.1} parent=1 // pred_check_branch
      %45 = sbr.rel (0) target = $region13
    $region12: #{tpu_custom_call.1} parent=1 // pred_region
      %47 = dma.done [#allocation3], 16
    $region13: #{tpu_custom_call.1} parent=1 // pred_fallthru
      _
    // Predicated region
    $region14: #{tpu_custom_call.1} parent=1 // pred_check
      _
    $region15: #{tpu_custom_call.1} parent=1 // pred_check_branch
      %49 = sbr.rel (0) target = $region17
    $region16: #{tpu_custom_call.1} parent=1 // pred_region
      %51 = dma.done [#allocation6], 256
    $region17: #{tpu_custom_call.1} parent=1 // pred_fallthru
      _
    %s52 = sadd.s32 0, 0
    %s53 = sadd.s32 0, 0
    %p54 = scmp.lt.s32.totalorder %s53, 0
    %s55 = scalar_select %p54, %s53, 0
    %s56 = smul.u32 2, %s55
    %s57 = sadd.s32 0, 0
    %p58 = scmp.eq.s32.totalorder 0, 0
    // Predicated region
    $region18: #{tpu_custom_call.1} parent=1 // pred_check
      %p59 = pneg %p58
    $region19: #{tpu_custom_call.1} parent=1 // pred_check_branch
      %61 = sbr.rel (%p59) target = $region21
    $region20: #{tpu_custom_call.1} parent=1 // pred_region
      %vm62 = vcmask 261120
      %63 = vst.msk [vmem:[#allocation7] sm:$0xff] %vm62, 0.0
      %vm64 = vcmask 7168
      %65 = vst.msk [vmem:[%s3] sm:$0xff] %vm64, 0.0
    $region21: #{tpu_custom_call.1} parent=1 // pred_fallthru
      _
    %v66 = vld [vmem:[#allocation2] sm:$0x1]
    %v67 = vlaneseq
    %v68 = vshrl.u32 %v67, 7
    %v69 = vperm.slane %v66, 0
    %vm70 = vcmp.eq.s32.totalorder %v68, %v69
    %v71 = vsel %vm70, 1, 0
    %v72 = vcvt.s32.f32 %v71
    %s73 = smul.u32 %s57, 16
    %v74 = vadd.s32 %v68, 8
    %v75 = vstv %s73
    %v76 = vadd.s32 %v68, %v75
    %v77 = vadd.s32 %v74, %v75
    %vm78 = vcmp.lt.s32.totalorder %v76, 16
    %vm79 = vcmp.lt.s32.totalorder %v77, 16
    %v80 = vld [vmem:[#allocation5] sm:$0xff]
    %v81 = vld [vmem:[#allocation5 + $0x8] sm:$0xff]
    %v82 = vsel %vm78, 1, 0
    %v83 = vsel %vm79, 1, 0
    %vm84 = vcmp.eq.s32.totalorder %v82, 1
    %vm85 = vcmp.eq.s32.totalorder %v83, 1
    %v86 = vsel %vm84, %v80, 0.0
    %v87 = vsel %vm85, %v81, 0.0
    %v88 = vld [vmem:[#allocation7] sm:$0xff]
    %vm89 = vcmask 130048
    %v91 = vsel %vm89, %v72, 0
    %93 = vmatpush.msra.mxu0 0.0
    %94 = vmatpush.msra.mxu0 0.0
    %95 = vmatpush.msra.mxu0 0.0
    %96 = vmatpush.msra.mxu0 0.0
    %97 = vmatpush.msra.mxu0 0.0
    %98 = vmatpush.msra.mxu0 0.0
    %99 = vmatpush.msra.mxu0 0.0
    %100 = vmatpush.msra.mxu0 0.0
    %101 = vmatpush.msra.mxu0 0.0
    %102 = vmatpush.msra.mxu0 0.0
    %103 = vmatpush.msra.mxu0 0.0
    %104 = vmatpush.msra.mxu0 0.0
    %105 = vmatpush.msra.mxu0 0.0
    %106 = vmatpush.msra.mxu0 0.0
    %107 = vmatpush.msra.mxu0 %v87
    %108 = vmatpush.msra.mxu0 %v86
    %109 = vmatmul.f32.gmra.mxu0 %v91
    %v110 = vpop.f32.mrf.mxu0
    %v111 = vadd.f32 0.0, %v110
    %112 = vdwg.mxu0
    %v113 = vadd.f32 %v88, %v111
    %vm114 = vcmask 261120
    %115 = vst.msk [vmem:[#allocation7] sm:$0xff] %vm114, %v113
    %v116 = vld [vmem:[%s3] sm:$0xff]
    %v117 = vsel %vm89, %v72, 0.0
    %118 = vadd.xlane.f32.xlu0 %v117
    %v119 = vpop.xlane.xlu0 %118
    %v120 = vadd.f32 %v116, %v119
    %vm121 = vcmask 7168
    %122 = vst.msk [vmem:[%s3] sm:$0xff] %vm121, %v120
    // Predicated region
    $region22: #{tpu_custom_call.1} parent=1 // pred_check
      _
    $region23: #{tpu_custom_call.1} parent=1 // pred_check_branch
      %124 = sbr.rel (0) target = $region25
    $region24: #{tpu_custom_call.1} parent=1 // pred_region
      %126 = vsyncadd [#allocation4], 0
      %s128 = sshll.u32 [#allocation7], 4
      %s129 = int_to_ptr.vmem [resolvable:$true] %s128
      %s130 = sshll.u32 %s2, 4
      %s131 = int_to_ptr.hbm [resolvable:$true] %s130
      %133 = dma.vmem_to_hbm [thread:$0]  %s129, 128, %s131, [#allocation4]
    $region25: #{tpu_custom_call.1} parent=1 // pred_fallthru
      _
    // Predicated region
    $region26: #{tpu_custom_call.1} parent=1 // pred_check
      _
    $region27: #{tpu_custom_call.1} parent=1 // pred_check_branch
      %135 = sbr.rel (0) target = $region29
    $region28: #{tpu_custom_call.1} parent=1 // pred_region
      _
    $region29: #{tpu_custom_call.1} parent=1 // pred_fallthru
      _
    // Predicated region
    $region30: #{tpu_custom_call.1} parent=1 // pred_check
      _
    $region31: #{tpu_custom_call.1} parent=1 // pred_check_branch
      %137 = sbr.rel (0) target = $region33
    $region32: #{tpu_custom_call.1} parent=1 // pred_region
      %139 = dma.done [#allocation4], 128
    $region33: #{tpu_custom_call.1} parent=1 // pred_fallthru
      _
    // Predicated region
    $region34: #{tpu_custom_call.1} parent=1 // pred_check
      _
    $region35: #{tpu_custom_call.1} parent=1 // pred_check_branch
      %141 = sbr.rel (0) target = $region37
    $region36: #{tpu_custom_call.1} parent=1 // pred_region
      _
    $region37: #{tpu_custom_call.1} parent=1 // pred_fallthru
      _
    %142 = vsyncpa [#allocation3], 1
    %143 = vsyncpa [#allocation6], 1
    %144 = vsyncpa [#allocation4], 1

</llo_original>
